<compile_context>
chip_gen: v7x
topology: tpu7x:2x2x1
jax: 0.10.0
libtpu: 0.0.40
codegen_flags: <defaults>
</compile_context>

<pallas_src>
import functools
import math

import jax
import jax.numpy as jnp
from jax import lax
from jax.experimental import pallas as pl
from jax.experimental.pallas import tpu as pltpu

EPS = 1e-12  # F.normalize default eps


def _normalize_f32(f):
    """F.normalize over dim=1: f / max(||f||, eps) == f * rsqrt(max(||f||^2, eps^2))."""
    f32 = f.astype(jnp.float32)
    sq = jnp.sum(f32 * f32, axis=-1, keepdims=True)
    return f32 * lax.rsqrt(jnp.maximum(sq, EPS * EPS))


def _cc_kernel_pairwise(feat_s_ref, feat_t_ref, loss_ref, *, inv_b2, gamma, p_order,
                        mxu_dtype):
    """Direct BxB similarity path (small/moderate B)."""
    fns = _normalize_f32(feat_s_ref[...]).astype(mxu_dtype)
    fnt = _normalize_f32(feat_t_ref[...]).astype(mxu_dtype)

    # Contract on the last (lane) dim of BOTH operands: no explicit transpose.
    dn = (((1,), (1,)), ((), ()))
    sim_s = lax.dot_general(fns, fns, dn, preferred_element_type=jnp.float32)
    sim_t = lax.dot_general(fnt, fnt, dn, preferred_element_type=jnp.float32)

    if p_order <= 1:
        # Only the constant q=0 term exists -> corr_s == corr_t exactly.
        loss_ref[0] = jnp.float32(0.0)
        return

    if p_order == 2:
        # q=0 terms cancel; corr_s - corr_t == coef1 * (sim_s - sim_t).
        coef1 = math.exp(-2.0 * gamma) * (2.0 * gamma)
        diff = sim_s - sim_t
        loss_ref[0] = jnp.sum(diff * diff) * jnp.float32(coef1 * coef1 * inv_b2)
        return

    # General truncated-Taylor path (q=0 term still cancels in the difference).
    diff = jnp.zeros_like(sim_s)
    pow_s = sim_s
    pow_t = sim_t
    for q in range(1, p_order):
        coef = math.exp(-2.0 * gamma) * (2.0 * gamma) ** q / math.factorial(q)
        diff = diff + coef * (pow_s - pow_t)
        if q + 1 < p_order:
            pow_s = pow_s * sim_s
            pow_t = pow_t * sim_t
    loss_ref[0] = jnp.sum(diff * diff) * jnp.float32(inv_b2)


def _cc_kernel_gram(feat_s_ref, feat_t_ref, loss_ref, *, inv_b2, gamma, mxu_dtype):
    """Large-B path (p == 2 only): DxD Gram / Frobenius identity, no BxB temporaries."""
    fns = _normalize_f32(feat_s_ref[...]).astype(mxu_dtype)
    fnt = _normalize_f32(feat_t_ref[...]).astype(mxu_dtype)

    dn = (((0,), (0,)), ((), ()))  # contract over the batch axis -> [D, D]
    g_ss = lax.dot_general(fns, fns, dn, preferred_element_type=jnp.float32)
    g_st = lax.dot_general(fns, fnt, dn, preferred_element_type=jnp.float32)
    g_tt = lax.dot_general(fnt, fnt, dn, preferred_element_type=jnp.float32)

    # ||S - T||_F^2 = ||Fs^T Fs||_F^2 - 2 ||Fs^T Ft||_F^2 + ||Ft^T Ft||_F^2
    sumsq = jnp.sum(g_ss * g_ss) - 2.0 * jnp.sum(g_st * g_st) + jnp.sum(g_tt * g_tt)
    sumsq = jnp.maximum(sumsq, 0.0)  # guard tiny negative from f32 cancellation
    coef1 = math.exp(-2.0 * gamma) * (2.0 * gamma)
    loss_ref[0] = sumsq * jnp.float32(coef1 * coef1 * inv_b2)


def _pad2d(x, rows, cols):
    r, c = x.shape
    if r == rows and c == cols:
        return x
    return jnp.pad(x, ((0, rows - r), (0, cols - c)))


def cc_loss(feat_s, feat_t, *, gamma=0.4, p=2):
    """feat_s, feat_t: [B, D] arrays. Returns scalar f32 CC loss."""
    assert feat_s.shape == feat_t.shape and feat_s.ndim == 2
    assert feat_s.dtype == feat_t.dtype
    b, d = feat_s.shape

    # Zero padding is exact: padded feature columns change neither norms nor
    # dot products, and all-zero (padded) rows contribute 0 to every sim entry
    # of BOTH student and teacher, hence 0 to the squared-difference sum.
    b_pad = max(8, pl.cdiv(b, 8) * 8)
    d_pad = max(128, pl.cdiv(d, 128) * 128)
    fs = _pad2d(feat_s, b_pad, d_pad)
    ft = _pad2d(feat_t, b_pad, d_pad)

    inv_b2 = 1.0 / float(b * b)          # mean over the TRUE BxB matrix
    mxu_dtype = jnp.bfloat16 if feat_s.dtype == jnp.bfloat16 else jnp.float32
    use_gram = (p == 2) and (b_pad > d_pad)

    if use_gram:
        kernel = functools.partial(_cc_kernel_gram, inv_b2=inv_b2, gamma=gamma,
                                   mxu_dtype=mxu_dtype)
        flops = 3 * 2 * b_pad * d_pad * d_pad
    else:
        kernel = functools.partial(_cc_kernel_pairwise, inv_b2=inv_b2, gamma=gamma,
                                   p_order=p, mxu_dtype=mxu_dtype)
        flops = 2 * 2 * b_pad * b_pad * d_pad

    bytes_accessed = 2 * fs.size * fs.dtype.itemsize + 4
    out = pl.pallas_call(
        kernel,
        out_shape=jax.ShapeDtypeStruct((1,), jnp.float32),
        in_specs=[
            pl.BlockSpec(memory_space=pltpu.VMEM),
            pl.BlockSpec(memory_space=pltpu.VMEM),
        ],
        out_specs=pl.BlockSpec(memory_space=pltpu.SMEM),
        cost_estimate=pl.CostEstimate(
            flops=flops, transcendentals=0, bytes_accessed=bytes_accessed),
    )(fs, ft)
    return out[0]


def _cc_loss_ref(feat_s, feat_t, gamma=0.4, p=2):
    """Pure-JAX reference mirroring the PyTorch module."""
    def corr(f):
        f = f.astype(jnp.float32)
        fn = f / jnp.maximum(jnp.linalg.norm(f, axis=-1, keepdims=True), EPS)
        sim = fn @ fn.T
        c = jnp.zeros_like(sim)
        for q in range(p):
            c = c + math.exp(-2.0 * gamma) * (2.0 * gamma) ** q / math.factorial(q) * sim ** q
        return c

    diff = corr(feat_s) - corr(feat_t)
    return jnp.mean(diff * diff)


if __name__ == "__main__":
    key = jax.random.PRNGKey(0)
    k1, k2, k3, k4 = jax.random.split(key, 4)

    # Case 1: tiny student/teacher embeddings -> pairwise (BxB) path.
    B, D = 8, 32
    feat_s = jax.random.normal(k1, (B, D), dtype=jnp.float32)
    feat_t = jax.random.normal(k2, (B, D), dtype=jnp.float32)
    loss = jax.jit(cc_loss)(feat_s, feat_t)
    jax.block_until_ready(loss)
    ref = _cc_loss_ref(feat_s, feat_t)
    assert jnp.allclose(loss, ref, rtol=1e-5, atol=1e-6), (loss, ref)

    # Case 2: batch larger than padded feature dim -> Gram (DxD) Frobenius path.
    B2, D2 = 160, 32
    feat_s2 = jax.random.normal(k3, (B2, D2), dtype=jnp.float32)
    feat_t2 = jax.random.normal(k4, (B2, D2), dtype=jnp.float32)
    loss2 = jax.jit(cc_loss)(feat_s2, feat_t2)
    jax.block_until_ready(loss2)
    ref2 = _cc_loss_ref(feat_s2, feat_t2)
    assert jnp.allclose(loss2, ref2, rtol=1e-4, atol=1e-6), (loss2, ref2)

    print("KERNEL_OK")
</pallas_src>

<mosaic_0001>
module attributes {stable_mosaic.version = 11 : i64} {
  func.func @_cc_kernel_pairwise(%arg0: memref<8x128xf32, #tpu.memory_space<vmem>>, %arg1: memref<8x128xf32, #tpu.memory_space<vmem>>, %arg2: memref<1xf32, #tpu.memory_space<smem>>) attributes {dimension_semantics = [], scalar_prefetch = 0 : i64, scratch_operands = 0 : i64, tpu.core_type = #tpu.core_type<tc>} {
    %c0 = arith.constant 0 : index
    %c0_0 = arith.constant 0 : index
    %0 = vector.load %arg0[%c0, %c0_0] : memref<8x128xf32, #tpu.memory_space<vmem>>, vector<8x128xf32>
    %1 = arith.mulf %0, %0 : vector<8x128xf32>
    %cst = arith.constant dense<0.000000e+00> : vector<8xf32>
    %2 = vector.multi_reduction <add>, %1, %cst [1] : vector<8x128xf32> to vector<8xf32>
    %3 = vector.shape_cast %2 : vector<8xf32> to vector<8x1xf32>
    %cst_1 = arith.constant 1.000000e-24 : f32
    %4 = vector.broadcast %cst_1 : f32 to vector<8x1xf32>
    %5 = arith.maximumf %3, %4 : vector<8x1xf32>
    %6 = math.rsqrt %5 : vector<8x1xf32>
    %7 = vector.broadcast %6 : vector<8x1xf32> to vector<8x128xf32>
    %8 = arith.mulf %0, %7 : vector<8x128xf32>
    %c0_2 = arith.constant 0 : index
    %c0_3 = arith.constant 0 : index
    %9 = vector.load %arg1[%c0_2, %c0_3] : memref<8x128xf32, #tpu.memory_space<vmem>>, vector<8x128xf32>
    %10 = arith.mulf %9, %9 : vector<8x128xf32>
    %cst_4 = arith.constant dense<0.000000e+00> : vector<8xf32>
    %11 = vector.multi_reduction <add>, %10, %cst_4 [1] : vector<8x128xf32> to vector<8xf32>
    %12 = vector.shape_cast %11 : vector<8xf32> to vector<8x1xf32>
    %cst_5 = arith.constant 1.000000e-24 : f32
    %13 = vector.broadcast %cst_5 : f32 to vector<8x1xf32>
    %14 = arith.maximumf %12, %13 : vector<8x1xf32>
    %15 = math.rsqrt %14 : vector<8x1xf32>
    %16 = vector.broadcast %15 : vector<8x1xf32> to vector<8x128xf32>
    %17 = arith.mulf %9, %16 : vector<8x128xf32>
    %cst_6 = arith.constant dense<0.000000e+00> : vector<8x8xf32>
    %18 = tpu.matmul %8, %8, %cst_6 {dimension_numbers = #tpu.dot_dimension_numbers<[1], [1], [0], [0], [0, 0, 1, 0], [], []>} : vector<8x128xf32>, vector<8x128xf32>, vector<8x8xf32> -> vector<8x8xf32>
    %cst_7 = arith.constant dense<0.000000e+00> : vector<8x8xf32>
    %19 = tpu.matmul %17, %17, %cst_7 {dimension_numbers = #tpu.dot_dimension_numbers<[1], [1], [0], [0], [0, 0, 1, 0], [], []>} : vector<8x128xf32>, vector<8x128xf32>, vector<8x8xf32> -> vector<8x8xf32>
    %20 = arith.subf %18, %19 : vector<8x8xf32>
    %21 = arith.mulf %20, %20 : vector<8x8xf32>
    %22 = vector.shape_cast %21 : vector<8x8xf32> to vector<1x8x8xf32>
    %cst_8 = arith.constant dense<0.000000e+00> : vector<1xf32>
    %23 = vector.multi_reduction <add>, %22, %cst_8 [1, 2] : vector<1x8x8xf32> to vector<1xf32>
    %24 = vector.shape_cast %23 : vector<1xf32> to vector<1x1x1xf32>
    %25 = vector.extract %24[0, 0, 0] : f32 from vector<1x1x1xf32>
    %cst_9 = arith.constant 0.00201896508 : f32
    %26 = arith.mulf %25, %cst_9 : f32
    %c0_10 = arith.constant 0 : index
    %27 = memref.load %arg2[%c0_10] : memref<1xf32, #tpu.memory_space<smem>>
    memref.store %26, %arg2[%c0_10] : memref<1xf32, #tpu.memory_space<smem>>
    return
  }
}

</mosaic_0001>

<llo_original>
// kernel: cc_loss.1
$region0: #{cc_loss.1}
  #allocation0 [shape = 'u32[]', space=smem, size = 0x4, offset = 0x4, fixed_abs, tag = 'smem constant byte address 0x4 - core index']
  #allocation1 [shape = 'u32[144,128]{1,0:T(1,128)}', space=vmem, size = 0x12000, scoped, tag = 'internal scratch']
  %s0 = inlined_call_operand.vmem [shape: f32[8,128], index: 0, kind: input, shape index: {}]
  %s1 = inlined_call_operand.vmem [shape: f32[8,128], index: 1, kind: input, shape index: {}]
  %s2 = inlined_call_operand.hbm [shape: f32[1], index: 2, kind: output, shape index: {}]
  %s3 = sld [smem:[#allocation0]]
  $region18: #{cc_loss.1} parent=0
    _
  %s5 = ssub.s32 1, %s3
  %s6 = scalar_select 0, %s5, %s3
  $region1: #{cc_loss.1} parent=0
    #allocation2 [shape = 'u8[512]{0}', space=smem, size = 0x200, scoped, tag = 'output window, operand 0, single buffered']
    #allocation3 [shape = 's32[1]{0}', space=sflag, size = 0x4, scoped, tag = 'scoped memory for cc_loss.1']
    %7 = vsyncpa [#allocation3], 0
    // Predicated region
    $region2: #{cc_loss.1} parent=1 // pred_check
      _
    $region3: #{cc_loss.1} parent=1 // pred_check_branch
      %9 = sbr.rel (0) target = $region5
    $region4: #{cc_loss.1} parent=1 // pred_region
      _
    $region5: #{cc_loss.1} parent=1 // pred_fallthru
      _
    // Predicated region
    $region6: #{cc_loss.1} parent=1 // pred_check
      _
    $region7: #{cc_loss.1} parent=1 // pred_check_branch
      %11 = sbr.rel (0) target = $region9
    $region8: #{cc_loss.1} parent=1 // pred_region
      _
    $region9: #{cc_loss.1} parent=1 // pred_fallthru
      _
    %v12 = vld [vmem:[%s0] sm:$0xff]
    %v13 = vmul.f32 %v12, %v12
    %14 = vadd.xlane.f32.xlu0 %v13
    %v15 = vpop.xlane.xlu0 %14
    %v16 = vmax.f32 %v15, 1e-24
    %v17 = vrsqrt.pop %v16
    %v18 = vmul.f32 %v12, %v17
    %v19 = vld [vmem:[%s1] sm:$0xff]
    %v20 = vmul.f32 %v19, %v19
    %21 = vadd.xlane.f32.xlu0 %v20
    %v22 = vpop.xlane.xlu0 %21
    %v23 = vmax.f32 %v22, 1e-24
    %v24 = vrsqrt.pop %v23
    %v25 = vmul.f32 %v19, %v24
    %26 = vmatprep.subr.mxu0 0.0
    %27 = vmatpush1.xpose.msra.mxu0 %v18
    %28 = vmatprep.subr.mxu0 0.0
    %29 = vmatpush1.xpose.msra.mxu0 0.0
    %30 = vmatprep.subr.mxu0 0.0
    %31 = vmatpush1.xpose.msra.mxu0 0.0
    %32 = vmatprep.subr.mxu0 0.0
    %33 = vmatpush1.xpose.msra.mxu0 0.0
    %34 = vmatprep.subr.mxu0 0.0
    %35 = vmatpush1.xpose.msra.mxu0 0.0
    %36 = vmatprep.subr.mxu0 0.0
    %37 = vmatpush1.xpose.msra.mxu0 0.0
    %38 = vmatprep.subr.mxu0 0.0
    %39 = vmatpush1.xpose.msra.mxu0 0.0
    %40 = vmatprep.subr.mxu0 0.0
    %41 = vmatpush1.xpose.msra.mxu0 0.0
    %42 = vmatprep.subr.mxu0 0.0
    %43 = vmatpush1.xpose.msra.mxu0 0.0
    %44 = vmatprep.subr.mxu0 0.0
    %45 = vmatpush1.xpose.msra.mxu0 0.0
    %46 = vmatprep.subr.mxu0 0.0
    %47 = vmatpush1.xpose.msra.mxu0 0.0
    %48 = vmatprep.subr.mxu0 0.0
    %49 = vmatpush1.xpose.msra.mxu0 0.0
    %50 = vmatprep.subr.mxu0 0.0
    %51 = vmatpush1.xpose.msra.mxu0 0.0
    %52 = vmatprep.subr.mxu0 0.0
    %53 = vmatpush1.xpose.msra.mxu0 0.0
    %54 = vmatprep.subr.mxu0 0.0
    %55 = vmatpush1.xpose.msra.mxu0 0.0
    %56 = vmatprep.subr.mxu0 0.0
    %57 = vmatpush1.xpose.msra.mxu0 0.0
    %58 = vmatprep.subr.mxu0 0.0
    %59 = vmatpush1.xpose.msra.mxu0 0.0
    %60 = vmatprep.subr.mxu0 0.0
    %61 = vmatpush1.xpose.msra.mxu0 0.0
    %62 = vmatprep.subr.mxu0 0.0
    %63 = vmatpush1.xpose.msra.mxu0 0.0
    %64 = vmatprep.subr.mxu0 0.0
    %65 = vmatpush1.xpose.msra.mxu0 0.0
    %66 = vmatprep.subr.mxu0 0.0
    %67 = vmatpush1.xpose.msra.mxu0 0.0
    %68 = vmatprep.subr.mxu0 0.0
    %69 = vmatpush1.xpose.msra.mxu0 0.0
    %70 = vmatprep.subr.mxu0 0.0
    %71 = vmatpush1.xpose.msra.mxu0 0.0
    %72 = vmatprep.subr.mxu0 0.0
    %73 = vmatpush1.xpose.msra.mxu0 0.0
    %74 = vmatprep.subr.mxu0 0.0
    %75 = vmatpush1.xpose.msra.mxu0 0.0
    %76 = vmatprep.subr.mxu0 0.0
    %77 = vmatpush1.xpose.msra.mxu0 0.0
    %78 = vmatprep.subr.mxu0 0.0
    %79 = vmatpush1.xpose.msra.mxu0 0.0
    %80 = vmatprep.subr.mxu0 0.0
    %81 = vmatpush1.xpose.msra.mxu0 0.0
    %82 = vmatprep.subr.mxu0 0.0
    %83 = vmatpush1.xpose.msra.mxu0 0.0
    %84 = vmatprep.subr.mxu0 0.0
    %85 = vmatpush1.xpose.msra.mxu0 0.0
    %86 = vmatprep.subr.mxu0 0.0
    %87 = vmatpush1.xpose.msra.mxu0 0.0
    %88 = vmatprep.subr.mxu0 0.0
    %89 = vmatpush1.xpose.msra.mxu0 0.0
    %90 = vmatprep.mubr.f32.mxu0 0.0
    %91 = vmatmul.mubr.f32.gmra.mrb[0].mxu0 %v18
    %v92 = vpop.f32.mrb[0].mxu0
    %v93 = vadd.f32 0.0, %v92
    %v94 = vpop.f32.mrb[0].mxu0
    %95 = vdwg.mxu0
    %96 = vmatprep.subr.mxu0 0.0
    %97 = vmatpush1.xpose.msra.mxu0 %v25
    %98 = vmatprep.subr.mxu0 0.0
    %99 = vmatpush1.xpose.msra.mxu0 0.0
    %100 = vmatprep.subr.mxu0 0.0
    %101 = vmatpush1.xpose.msra.mxu0 0.0
    %102 = vmatprep.subr.mxu0 0.0
    %103 = vmatpush1.xpose.msra.mxu0 0.0
    %104 = vmatprep.subr.mxu0 0.0
    %105 = vmatpush1.xpose.msra.mxu0 0.0
    %106 = vmatprep.subr.mxu0 0.0
    %107 = vmatpush1.xpose.msra.mxu0 0.0
    %108 = vmatprep.subr.mxu0 0.0
    %109 = vmatpush1.xpose.msra.mxu0 0.0
    %110 = vmatprep.subr.mxu0 0.0
    %111 = vmatpush1.xpose.msra.mxu0 0.0
    %112 = vmatprep.subr.mxu0 0.0
    %113 = vmatpush1.xpose.msra.mxu0 0.0
    %114 = vmatprep.subr.mxu0 0.0
    %115 = vmatpush1.xpose.msra.mxu0 0.0
    %116 = vmatprep.subr.mxu0 0.0
    %117 = vmatpush1.xpose.msra.mxu0 0.0
    %118 = vmatprep.subr.mxu0 0.0
    %119 = vmatpush1.xpose.msra.mxu0 0.0
    %120 = vmatprep.subr.mxu0 0.0
    %121 = vmatpush1.xpose.msra.mxu0 0.0
    %122 = vmatprep.subr.mxu0 0.0
    %123 = vmatpush1.xpose.msra.mxu0 0.0
    %124 = vmatprep.subr.mxu0 0.0
    %125 = vmatpush1.xpose.msra.mxu0 0.0
    %126 = vmatprep.subr.mxu0 0.0
    %127 = vmatpush1.xpose.msra.mxu0 0.0
    %128 = vmatprep.subr.mxu0 0.0
    %129 = vmatpush1.xpose.msra.mxu0 0.0
    %130 = vmatprep.subr.mxu0 0.0
    %131 = vmatpush1.xpose.msra.mxu0 0.0
    %132 = vmatprep.subr.mxu0 0.0
    %133 = vmatpush1.xpose.msra.mxu0 0.0
    %134 = vmatprep.subr.mxu0 0.0
    %135 = vmatpush1.xpose.msra.mxu0 0.0
    %136 = vmatprep.subr.mxu0 0.0
    %137 = vmatpush1.xpose.msra.mxu0 0.0
    %138 = vmatprep.subr.mxu0 0.0
    %139 = vmatpush1.xpose.msra.mxu0 0.0
    %140 = vmatprep.subr.mxu0 0.0
    %141 = vmatpush1.xpose.msra.mxu0 0.0
    %142 = vmatprep.subr.mxu0 0.0
    %143 = vmatpush1.xpose.msra.mxu0 0.0
    %144 = vmatprep.subr.mxu0 0.0
    %145 = vmatpush1.xpose.msra.mxu0 0.0
    %146 = vmatprep.subr.mxu0 0.0
    %147 = vmatpush1.xpose.msra.mxu0 0.0
    %148 = vmatprep.subr.mxu0 0.0
    %149 = vmatpush1.xpose.msra.mxu0 0.0
    %150 = vmatprep.subr.mxu0 0.0
    %151 = vmatpush1.xpose.msra.mxu0 0.0
    %152 = vmatprep.subr.mxu0 0.0
    %153 = vmatpush1.xpose.msra.mxu0 0.0
    %154 = vmatprep.subr.mxu0 0.0
    %155 = vmatpush1.xpose.msra.mxu0 0.0
    %156 = vmatprep.subr.mxu0 0.0
    %157 = vmatpush1.xpose.msra.mxu0 0.0
    %158 = vmatprep.subr.mxu0 0.0
    %159 = vmatpush1.xpose.msra.mxu0 0.0
    %160 = vmatprep.mubr.f32.mxu0 0.0
    %161 = vmatmul.mubr.f32.gmra.mrb[0].mxu0 %v25
    %v162 = vpop.f32.mrb[0].mxu0
    %v163 = vadd.f32 0.0, %v162
    %v164 = vpop.f32.mrb[0].mxu0
    %165 = vdwg.mxu0
    %v166 = vsub.f32 %v93, %v163
    %v167 = vmul.f32 %v166, %v166
    %vm168 = vcmask 64512
    %v169 = vsel %vm168, %v167, 0.0
    %170 = vadd.xlane.f32.xlu0 %v169
    %v171 = vpop.xlane.xlu0 %170
    %v172 = vrot.slane %v171, 4
    %v173 = vadd.f32 %v171, %v172
    %v174 = vrot.slane %v173, 2
    %v175 = vadd.f32 %v173, %v174
    %v176 = vrot.slane %v175, 1
    %v177 = vadd.f32 %v175, %v176
    %s178 = vtos %v177
    %s179 = smul.f32 %s178, 0.002018965
    %s180 = scalar_lea.smem [#allocation2], 0
    %181 = sst [smem:[%s180]] %s179
    // Predicated region
    $region10: #{cc_loss.1} parent=1 // pred_check
      _
    $region11: #{cc_loss.1} parent=1 // pred_check_branch
      %183 = sbr.rel (0) target = $region13
    $region12: #{cc_loss.1} parent=1 // pred_region
      %s185 = ssub.s32 16, 16
      %186 = vsyncadd [#allocation3], %s185
      %189 = dma.smem_to_hbm [#allocation2], 16, %s2, [#allocation3]
    $region13: #{cc_loss.1} parent=1 // pred_fallthru
      _
    // Predicated region
    $region14: #{cc_loss.1} parent=1 // pred_check
      _
    $region15: #{cc_loss.1} parent=1 // pred_check_branch
      %191 = sbr.rel (0) target = $region17
    $region16: #{cc_loss.1} parent=1 // pred_region
      %192 = dma.done [#allocation3], 16
    $region17: #{cc_loss.1} parent=1 // pred_fallthru
      _
    %193 = sfence
    %194 = vsyncpa [#allocation3], 1

</llo_original>
